<compile_context>
chip_gen: v7x
topology: tpu7x:2x2x1
jax: 0.10.0
libtpu: 0.0.40
codegen_flags: <defaults>
</compile_context>

<pallas_src>
import functools

import jax
import jax.numpy as jnp
from jax.experimental import pallas as pl
from jax.experimental.pallas import tpu as pltpu

_CLASS_PAD = 128          # lane-dense output width (>= num_classes)
_NEG_LARGE = -1.0e30      # bias for padded classes -> exp() == 0 in log_softmax
_MAX_TILE_B = 256         # batch rows per grid step (fits VMEM with huge margin)


def _mlp_logsoftmax_kernel(x_ref, w1_ref, b1_ref, w2_ref, b2_ref,
                           w3_ref, b3_ref, o_ref, *, slope, use_bf16):
    x = x_ref[...]

    if use_bf16:
        # bf16 operands, f32 accumulation on the MXU (lever for larger dims).
        def mm(a, w_ref):
            return jnp.dot(a.astype(jnp.bfloat16), w_ref[...].astype(jnp.bfloat16),
                           preferred_element_type=jnp.float32)
    else:
        def mm(a, w_ref):
            return jnp.dot(a, w_ref[...], preferred_element_type=jnp.float32)

    # hidden1 + LeakyReLU
    h1 = mm(x, w1_ref) + b1_ref[...]
    h1 = jnp.where(h1 > 0, h1, slope * h1)

    # TODO(synk): training-mode dropout (Bernoulli mask via pltpu.prng_*) not
    # implemented; eval-mode dropout is identity, matching inference semantics.

    # hidden2 + LeakyReLU
    h2 = mm(h1, w2_ref) + b2_ref[...]
    h2 = jnp.where(h2 > 0, h2, slope * h2)

    # theta (output layer); padded classes get logit == -1e30 exactly
    logits = mm(h2, w3_ref) + b3_ref[...]

    # log_softmax along the class axis (pad classes contribute exp(-huge) == 0)
    m = jnp.max(logits, axis=-1, keepdims=True)
    shifted = logits - m
    lse = jnp.log(jnp.sum(jnp.exp(shifted), axis=-1, keepdims=True))
    o_ref[...] = (shifted - lse).astype(o_ref.dtype)


def prepare_params_for_kernel(params, num_classes):
    """One-time layout prep (do NOT call per forward): (in,out) weights,
    (1,out) biases, class axis padded to 128 lanes."""
    h2 = params["w3"].shape[1]
    w3_pad = jnp.zeros((h2, _CLASS_PAD), jnp.float32).at[:, :num_classes].set(
        params["w3"].T)
    b3_pad = jnp.full((1, _CLASS_PAD), _NEG_LARGE, jnp.float32).at[0, :num_classes].set(
        params["b3"])
    return {
        "w1": params["w1"].T, "b1": params["b1"][None, :],
        "w2": params["w2"].T, "b2": params["b2"][None, :],
        "w3": w3_pad, "b3": b3_pad,
    }


def deep_network_forward(x, kparams, *, leaky_relu_negative_slope, num_classes,
                         use_bf16=False):
    """x: (B, E) float32. kparams: output of prepare_params_for_kernel."""
    B, E = x.shape

    tile_b = B if B <= _MAX_TILE_B else _MAX_TILE_B
    grid = (pl.cdiv(B, tile_b),)

    # Constants (weights/biases): constant index_map -> stay VMEM-resident
    # across all batch-tile steps (no re-DMA).
    def const(arr):
        return pl.BlockSpec(arr.shape, lambda i: tuple(0 for _ in arr.shape))

    kernel = functools.partial(_mlp_logsoftmax_kernel,
                               slope=float(leaky_relu_negative_slope),
                               use_bf16=use_bf16)

    out_padded = pl.pallas_call(
        kernel,
        out_shape=jax.ShapeDtypeStruct((B, _CLASS_PAD), jnp.float32),
        grid_spec=pltpu.PrefetchScalarGridSpec(
            num_scalar_prefetch=0,
            grid=grid,
            in_specs=[
                pl.BlockSpec((tile_b, E), lambda i: (i, 0)),      # x walks batch
                const(kparams["w1"]), const(kparams["b1"]),
                const(kparams["w2"]), const(kparams["b2"]),
                const(kparams["w3"]), const(kparams["b3"]),
            ],
            out_specs=pl.BlockSpec((tile_b, _CLASS_PAD), lambda i: (i, 0)),
        ),
        compiler_params=pltpu.CompilerParams(
            dimension_semantics=("parallel",),   # megacore split on v7x
            vmem_limit_bytes=64 << 20,           # explicit; safe on v7x's 64 MiB
        ),
    )(x, kparams["w1"], kparams["b1"], kparams["w2"], kparams["b2"],
      kparams["w3"], kparams["b3"])

    return out_padded[:, :num_classes]


def init_params(key, embedding_dim, hidden_dim1, hidden_dim2, num_classes):
    """Deterministic init mimicking nn.Linear's U(-1/sqrt(in), 1/sqrt(in)).
    Returns PyTorch-layout params (w: (out,in), b: (out,))."""
    ks = jax.random.split(key, 6)

    def lin(kw, kb, fan_in, fan_out):
        bound = 1.0 / jnp.sqrt(jnp.float32(fan_in))
        w = jax.random.uniform(kw, (fan_out, fan_in), jnp.float32, -bound, bound)
        b = jax.random.uniform(kb, (fan_out,), jnp.float32, -bound, bound)
        return w, b

    w1, b1 = lin(ks[0], ks[1], embedding_dim, hidden_dim1)
    w2, b2 = lin(ks[2], ks[3], hidden_dim1, hidden_dim2)
    w3, b3 = lin(ks[4], ks[5], hidden_dim2, num_classes)
    return {"w1": w1, "b1": b1, "w2": w2, "b2": b2, "w3": w3, "b3": b3}


def _reference(x, params, slope):
    """Pure-JAX reference of the PyTorch forward (eval mode)."""
    h1 = x @ params["w1"].T + params["b1"]
    h1 = jnp.where(h1 > 0, h1, slope * h1)
    h2 = h1 @ params["w2"].T + params["b2"]
    h2 = jnp.where(h2 > 0, h2, slope * h2)
    logits = h2 @ params["w3"].T + params["b3"]
    return jax.nn.log_softmax(logits, axis=1)


if __name__ == "__main__":
    num_classes = 2
    embedding_dim = 32
    hidden_dim1 = 64
    hidden_dim2 = 32
    slope = 0.01
    batch = 8

    key = jax.random.PRNGKey(0)
    k_x, k_p = jax.random.split(key)
    x = jax.random.normal(k_x, (batch, embedding_dim), jnp.float32)
    params = init_params(k_p, embedding_dim, hidden_dim1, hidden_dim2, num_classes)

    # One-time layout prep (cached pytree, reused across forward calls).
    kparams = prepare_params_for_kernel(params, num_classes)

    out = deep_network_forward(x, kparams,
                               leaky_relu_negative_slope=slope,
                               num_classes=num_classes)
    out = jax.block_until_ready(out)

    ref = _reference(x, params, slope)
    assert out.shape == (batch, num_classes), out.shape
    assert jnp.allclose(out, ref, atol=1e-5, rtol=1e-5), "mismatch vs reference"

    print("KERNEL_OK")
</pallas_src>

<mosaic_0001>
module attributes {stable_mosaic.version = 11 : i64} {
  func.func @_mlp_logsoftmax_kernel(%arg0: i32, %arg1: memref<8x32xf32, #tpu.memory_space<vmem>>, %arg2: memref<32x64xf32, #tpu.memory_space<vmem>>, %arg3: memref<1x64xf32, #tpu.memory_space<vmem>>, %arg4: memref<64x32xf32, #tpu.memory_space<vmem>>, %arg5: memref<1x32xf32, #tpu.memory_space<vmem>>, %arg6: memref<32x128xf32, #tpu.memory_space<vmem>>, %arg7: memref<1x128xf32, #tpu.memory_space<vmem>>, %arg8: memref<8x128xf32, #tpu.memory_space<vmem>>) attributes {dimension_semantics = [#tpu.dimension_semantics<parallel>], iteration_bounds = array<i64: 1>, scalar_prefetch = 0 : i64, scratch_operands = 0 : i64, tpu.core_type = #tpu.core_type<tc>, window_params = [{transform_indices = @transform_0, window_bounds = array<i64: 8, 32>}, {pipeline_mode = #tpu.pipeline_mode<synchronous>, transform_indices = @transform_1, window_bounds = array<i64: 32, 64>}, {pipeline_mode = #tpu.pipeline_mode<synchronous>, transform_indices = @transform_2, window_bounds = array<i64: 1, 64>}, {pipeline_mode = #tpu.pipeline_mode<synchronous>, transform_indices = @transform_3, window_bounds = array<i64: 64, 32>}, {pipeline_mode = #tpu.pipeline_mode<synchronous>, transform_indices = @transform_4, window_bounds = array<i64: 1, 32>}, {pipeline_mode = #tpu.pipeline_mode<synchronous>, transform_indices = @transform_5, window_bounds = array<i64: 32, 128>}, {pipeline_mode = #tpu.pipeline_mode<synchronous>, transform_indices = @transform_6, window_bounds = array<i64: 1, 128>}, {transform_indices = @transform_7, window_bounds = array<i64: 8, 128>}]} {
    %c0 = arith.constant 0 : index
    %c0_0 = arith.constant 0 : index
    %0 = vector.load %arg1[%c0, %c0_0] : memref<8x32xf32, #tpu.memory_space<vmem>>, vector<8x32xf32>
    %c0_1 = arith.constant 0 : index
    %c0_2 = arith.constant 0 : index
    %1 = vector.load %arg2[%c0_1, %c0_2] : memref<32x64xf32, #tpu.memory_space<vmem>>, vector<32x64xf32>
    %cst = arith.constant dense<0.000000e+00> : vector<8x64xf32>
    %2 = tpu.matmul %0, %1, %cst {dimension_numbers = #tpu.dot_dimension_numbers<[1], [0], [0], [1], [0, 0, 1, 1], [], []>} : vector<8x32xf32>, vector<32x64xf32>, vector<8x64xf32> -> vector<8x64xf32>
    %c0_3 = arith.constant 0 : index
    %c0_4 = arith.constant 0 : index
    %3 = vector.load %arg3[%c0_3, %c0_4] : memref<1x64xf32, #tpu.memory_space<vmem>>, vector<1x64xf32>
    %4 = vector.broadcast %3 : vector<1x64xf32> to vector<8x64xf32>
    %5 = arith.addf %2, %4 : vector<8x64xf32>
    %cst_5 = arith.constant 0.000000e+00 : f32
    %6 = vector.broadcast %cst_5 : f32 to vector<8x64xf32>
    %7 = arith.cmpf ogt, %5, %6 : vector<8x64xf32>
    %cst_6 = arith.constant 0.00999999977 : f32
    %8 = vector.broadcast %cst_6 : f32 to vector<8x64xf32>
    %9 = arith.mulf %8, %5 : vector<8x64xf32>
    %10 = arith.select %7, %5, %9 : vector<8x64xi1>, vector<8x64xf32>
    %c0_7 = arith.constant 0 : index
    %c0_8 = arith.constant 0 : index
    %11 = vector.load %arg4[%c0_7, %c0_8] : memref<64x32xf32, #tpu.memory_space<vmem>>, vector<64x32xf32>
    %cst_9 = arith.constant dense<0.000000e+00> : vector<8x32xf32>
    %12 = tpu.matmul %10, %11, %cst_9 {dimension_numbers = #tpu.dot_dimension_numbers<[1], [0], [0], [1], [0, 0, 1, 1], [], []>} : vector<8x64xf32>, vector<64x32xf32>, vector<8x32xf32> -> vector<8x32xf32>
    %c0_10 = arith.constant 0 : index
    %c0_11 = arith.constant 0 : index
    %13 = vector.load %arg5[%c0_10, %c0_11] : memref<1x32xf32, #tpu.memory_space<vmem>>, vector<1x32xf32>
    %14 = vector.broadcast %13 : vector<1x32xf32> to vector<8x32xf32>
    %15 = arith.addf %12, %14 : vector<8x32xf32>
    %cst_12 = arith.constant 0.000000e+00 : f32
    %16 = vector.broadcast %cst_12 : f32 to vector<8x32xf32>
    %17 = arith.cmpf ogt, %15, %16 : vector<8x32xf32>
    %cst_13 = arith.constant 0.00999999977 : f32
    %18 = vector.broadcast %cst_13 : f32 to vector<8x32xf32>
    %19 = arith.mulf %18, %15 : vector<8x32xf32>
    %20 = arith.select %17, %15, %19 : vector<8x32xi1>, vector<8x32xf32>
    %c0_14 = arith.constant 0 : index
    %c0_15 = arith.constant 0 : index
    %21 = vector.load %arg6[%c0_14, %c0_15] : memref<32x128xf32, #tpu.memory_space<vmem>>, vector<32x128xf32>
    %cst_16 = arith.constant dense<0.000000e+00> : vector<8x128xf32>
    %22 = tpu.matmul %20, %21, %cst_16 {dimension_numbers = #tpu.dot_dimension_numbers<[1], [0], [0], [1], [0, 0, 1, 1], [], []>} : vector<8x32xf32>, vector<32x128xf32>, vector<8x128xf32> -> vector<8x128xf32>
    %c0_17 = arith.constant 0 : index
    %c0_18 = arith.constant 0 : index
    %23 = vector.load %arg7[%c0_17, %c0_18] : memref<1x128xf32, #tpu.memory_space<vmem>>, vector<1x128xf32>
    %24 = vector.broadcast %23 : vector<1x128xf32> to vector<8x128xf32>
    %25 = arith.addf %22, %24 : vector<8x128xf32>
    %cst_19 = arith.constant dense<0xFF800000> : vector<8xf32>
    %26 = vector.multi_reduction <maximumf>, %25, %cst_19 [1] : vector<8x128xf32> to vector<8xf32>
    %27 = vector.shape_cast %26 : vector<8xf32> to vector<8x1xf32>
    %28 = vector.broadcast %27 : vector<8x1xf32> to vector<8x128xf32>
    %29 = arith.subf %25, %28 : vector<8x128xf32>
    %30 = math.exp %29 : vector<8x128xf32>
    %cst_20 = arith.constant dense<0.000000e+00> : vector<8xf32>
    %31 = vector.multi_reduction <add>, %30, %cst_20 [1] : vector<8x128xf32> to vector<8xf32>
    %32 = vector.shape_cast %31 : vector<8xf32> to vector<8x1xf32>
    %33 = math.log %32 : vector<8x1xf32>
    %34 = vector.broadcast %33 : vector<8x1xf32> to vector<8x128xf32>
    %35 = arith.subf %29, %34 : vector<8x128xf32>
    %c0_21 = arith.constant 0 : index
    %c0_22 = arith.constant 0 : index
    %36 = vector.load %arg8[%c0_21, %c0_22] : memref<8x128xf32, #tpu.memory_space<vmem>>, vector<8x128xf32>
    tpu.vector_store %arg8[%c0_21, %c0_22], %35 {strides = array<i32>} : memref<8x128xf32, #tpu.memory_space<vmem>>, vector<8x128xf32>,
    return
  }
  func.func @transform_0(%arg0: i32) -> (i32, i32) {
    %c0_i32 = arith.constant 0 : i32
    %c0_i32_0 = arith.constant 0 : i32
    return %arg0, %c0_i32 : i32, i32
  }
  func.func @transform_1(%arg0: i32) -> (i32, i32) {
    %c0_i32 = arith.constant 0 : i32
    %c0_i32_0 = arith.constant 0 : i32
    %c0_i32_1 = arith.constant 0 : i32
    return %c0_i32, %c0_i32_0 : i32, i32
  }
  func.func @transform_2(%arg0: i32) -> (i32, i32) {
    %c0_i32 = arith.constant 0 : i32
    %c0_i32_0 = arith.constant 0 : i32
    %c0_i32_1 = arith.constant 0 : i32
    return %c0_i32, %c0_i32_0 : i32, i32
  }
  func.func @transform_3(%arg0: i32) -> (i32, i32) {
    %c0_i32 = arith.constant 0 : i32
    %c0_i32_0 = arith.constant 0 : i32
    %c0_i32_1 = arith.constant 0 : i32
    return %c0_i32, %c0_i32_0 : i32, i32
  }
  func.func @transform_4(%arg0: i32) -> (i32, i32) {
    %c0_i32 = arith.constant 0 : i32
    %c0_i32_0 = arith.constant 0 : i32
    %c0_i32_1 = arith.constant 0 : i32
    return %c0_i32, %c0_i32_0 : i32, i32
  }
  func.func @transform_5(%arg0: i32) -> (i32, i32) {
    %c0_i32 = arith.constant 0 : i32
    %c0_i32_0 = arith.constant 0 : i32
    %c0_i32_1 = arith.constant 0 : i32
    return %c0_i32, %c0_i32_0 : i32, i32
  }
  func.func @transform_6(%arg0: i32) -> (i32, i32) {
    %c0_i32 = arith.constant 0 : i32
    %c0_i32_0 = arith.constant 0 : i32
    %c0_i32_1 = arith.constant 0 : i32
    return %c0_i32, %c0_i32_0 : i32, i32
  }
  func.func @transform_7(%arg0: i32) -> (i32, i32) {
    %c0_i32 = arith.constant 0 : i32
    %c0_i32_0 = arith.constant 0 : i32
    return %arg0, %c0_i32 : i32, i32
  }
}

</mosaic_0001>

<llo_original>
// kernel: tpu_custom_call.1
$region0: #{tpu_custom_call.1}
  #allocation0 [shape = 'u32[]', space=smem, size = 0x4, offset = 0x4, fixed_abs, tag = 'smem constant byte address 0x4 - core index']
  #allocation1 [shape = 'u32[144,128]{1,0:T(1,128)}', space=vmem, size = 0x12000, scoped, tag = 'internal scratch']
  %s0 = inlined_call_operand.hbm [shape: f32[8,32], index: 0, kind: input, shape index: {}]
  %s1 = inlined_call_operand.hbm [shape: f32[32,64], index: 1, kind: input, shape index: {}]
  %s2 = inlined_call_operand.hbm [shape: f32[1,64], index: 2, kind: input, shape index: {}]
  %s3 = inlined_call_operand.hbm [shape: f32[64,32], index: 3, kind: input, shape index: {}]
  %s4 = inlined_call_operand.hbm [shape: f32[1,32], index: 4, kind: input, shape index: {}]
  %s5 = inlined_call_operand.hbm [shape: f32[32,128], index: 5, kind: input, shape index: {}]
  %s6 = inlined_call_operand.hbm [shape: f32[1,128], index: 6, kind: input, shape index: {}]
  %s7 = inlined_call_operand.hbm [shape: f32[8,128], index: 7, kind: output, shape index: {}]
  %s8 = sld [smem:[#allocation0]]
  $region66: #{tpu_custom_call.1} parent=0
    _
  %s10 = ssub.s32 1, %s8
  %s11 = scalar_select 0, %s10, %s8
  $region1: #{tpu_custom_call.1} parent=0
    #allocation2 [shape = 'u8[4096]{0}', space=vmem, size = 0x1000, scoped, tag = 'input window, operand 0, single buffered']
    #allocation3 [shape = 's32[1]{0}', space=sflag, size = 0x4, scoped, tag = 'scoped memory for tpu_custom_call.1']
    #allocation4 [shape = 's32[1]{0}', space=sflag, size = 0x4, scoped, tag = 'scoped memory for tpu_custom_call.1']
    #allocation5 [shape = 'u8[16384]{0}', space=vmem, size = 0x4000, scoped, tag = 'input window, operand 1, single buffered']
    #allocation6 [shape = 's32[1]{0}', space=sflag, size = 0x4, scoped, tag = 'scoped memory for tpu_custom_call.1']
    #allocation7 [shape = 'u8[512]{0}', space=vmem, size = 0x400, scoped, tag = 'input window, operand 2, single buffered']
    #allocation8 [shape = 'u8[32768]{0}', space=vmem, size = 0x8000, scoped, tag = 'input window, operand 3, single buffered']
    #allocation9 [shape = 's32[1]{0}', space=sflag, size = 0x4, scoped, tag = 'scoped memory for tpu_custom_call.1']
    #allocation10 [shape = 'u8[512]{0}', space=vmem, size = 0x400, scoped, tag = 'input window, operand 4, single buffered']
    #allocation11 [shape = 'u8[16384]{0}', space=vmem, size = 0x4000, scoped, tag = 'input window, operand 5, single buffered']
    #allocation12 [shape = 's32[1]{0}', space=sflag, size = 0x4, scoped, tag = 'scoped memory for tpu_custom_call.1']
    #allocation13 [shape = 'u8[512]{0}', space=vmem, size = 0x400, scoped, tag = 'input window, operand 6, single buffered']
    #allocation14 [shape = 'u8[4096]{0}', space=vmem, size = 0x1000, scoped, tag = 'output window, operand 0, single buffered']
    %12 = vsyncpa [#allocation3], 0
    %13 = vsyncpa [#allocation6], 0
    %14 = vsyncpa [#allocation9], 0
    %15 = vsyncpa [#allocation12], 0
    %16 = vsyncpa [#allocation4], 0
    // Predicated region
    $region2: #{tpu_custom_call.1} parent=1 // pred_check
      _
    $region3: #{tpu_custom_call.1} parent=1 // pred_check_branch
      %18 = sbr.rel (0) target = $region5
    $region4: #{tpu_custom_call.1} parent=1 // pred_region
      %s20 = ssub.s32 128, 128
      %21 = vsyncadd [#allocation3], %s20
      %s23 = sshll.u32 [#allocation2], 4
      %s24 = int_to_ptr.vmem [resolvable:$true] %s23
      %26 = dma.hbm_to_vmem [thread:$0]  %s0, 128, %s24, [#allocation3]
    $region5: #{tpu_custom_call.1} parent=1 // pred_fallthru
      _
    // Predicated region
    $region6: #{tpu_custom_call.1} parent=1 // pred_check
      _
    $region7: #{tpu_custom_call.1} parent=1 // pred_check_branch
      %28 = sbr.rel (0) target = $region9
    $region8: #{tpu_custom_call.1} parent=1 // pred_region
      %s30 = ssub.s32 512, 512
      %31 = vsyncadd [#allocation6], %s30
      %s32 = sshll.u32 [#allocation5], 4
      %s33 = int_to_ptr.vmem [resolvable:$true] %s32
      %38 = dma.hbm_to_vmem [thread:$0]  %s1, 512, %s33, [#allocation6], 128, 128, 8
    $region9: #{tpu_custom_call.1} parent=1 // pred_fallthru
      _
    // Predicated region
    $region10: #{tpu_custom_call.1} parent=1 // pred_check
      _
    $region11: #{tpu_custom_call.1} parent=1 // pred_check_branch
      %40 = sbr.rel (0) target = $region13
    $region12: #{tpu_custom_call.1} parent=1 // pred_region
      %s42 = ssub.s32 16, 16
      %43 = vsyncadd [#allocation6], %s42
      %s45 = sshll.u32 [#allocation7], 4
      %s46 = int_to_ptr.vmem [resolvable:$true] %s45
      %48 = dma.hbm_to_vmem [thread:$0]  %s2, 16, %s46, [#allocation6]
    $region13: #{tpu_custom_call.1} parent=1 // pred_fallthru
      _
    // Predicated region
    $region14: #{tpu_custom_call.1} parent=1 // pred_check
      _
    $region15: #{tpu_custom_call.1} parent=1 // pred_check_branch
      %50 = sbr.rel (0) target = $region17
    $region16: #{tpu_custom_call.1} parent=1 // pred_region
      %s52 = ssub.s32 1024, 1024
      %53 = vsyncadd [#allocation9], %s52
      %s54 = sshll.u32 [#allocation8], 4
      %s55 = int_to_ptr.vmem [resolvable:$true] %s54
      %60 = dma.hbm_to_vmem [thread:$0]  %s3, 1024, %s55, [#allocation9], 128, 128, 8
    $region17: #{tpu_custom_call.1} parent=1 // pred_fallthru
      _
    // Predicated region
    $region18: #{tpu_custom_call.1} parent=1 // pred_check
      _
    $region19: #{tpu_custom_call.1} parent=1 // pred_check_branch
      %62 = sbr.rel (0) target = $region21
    $region20: #{tpu_custom_call.1} parent=1 // pred_region
      %s64 = ssub.s32 16, 16
      %65 = vsyncadd [#allocation9], %s64
      %s67 = sshll.u32 [#allocation10], 4
      %s68 = int_to_ptr.vmem [resolvable:$true] %s67
      %70 = dma.hbm_to_vmem [thread:$0]  %s4, 16, %s68, [#allocation9]
    $region21: #{tpu_custom_call.1} parent=1 // pred_fallthru
      _
    // Predicated region
    $region22: #{tpu_custom_call.1} parent=1 // pred_check
      _
    $region23: #{tpu_custom_call.1} parent=1 // pred_check_branch
      %72 = sbr.rel (0) target = $region25
    $region24: #{tpu_custom_call.1} parent=1 // pred_region
      %s74 = ssub.s32 512, 512
      %75 = vsyncadd [#allocation12], %s74
      %s76 = sshll.u32 [#allocation11], 4
      %s77 = int_to_ptr.vmem [resolvable:$true] %s76
      %82 = dma.hbm_to_vmem [thread:$0]  %s5, 512, %s77, [#allocation12], 128, 128, 8
    $region25: #{tpu_custom_call.1} parent=1 // pred_fallthru
      _
    // Predicated region
    $region26: #{tpu_custom_call.1} parent=1 // pred_check
      _
    $region27: #{tpu_custom_call.1} parent=1 // pred_check_branch
      %84 = sbr.rel (0) target = $region29
    $region28: #{tpu_custom_call.1} parent=1 // pred_region
      %s86 = ssub.s32 16, 16
      %87 = vsyncadd [#allocation12], %s86
      %s89 = sshll.u32 [#allocation13], 4
      %s90 = int_to_ptr.vmem [resolvable:$true] %s89
      %92 = dma.hbm_to_vmem [thread:$0]  %s6, 16, %s90, [#allocation12]
    $region29: #{tpu_custom_call.1} parent=1 // pred_fallthru
      _
    // Predicated region
    $region30: #{tpu_custom_call.1} parent=1 // pred_check
      _
    $region31: #{tpu_custom_call.1} parent=1 // pred_check_branch
      %94 = sbr.rel (0) target = $region33
    $region32: #{tpu_custom_call.1} parent=1 // pred_region
      %95 = dma.done [#allocation3], 128
    $region33: #{tpu_custom_call.1} parent=1 // pred_fallthru
      _
    // Predicated region
    $region34: #{tpu_custom_call.1} parent=1 // pred_check
      _
    $region35: #{tpu_custom_call.1} parent=1 // pred_check_branch
      %97 = sbr.rel (0) target = $region37
    $region36: #{tpu_custom_call.1} parent=1 // pred_region
      %98 = dma.done [#allocation6], 512
    $region37: #{tpu_custom_call.1} parent=1 // pred_fallthru
      _
    // Predicated region
    $region38: #{tpu_custom_call.1} parent=1 // pred_check
      _
    $region39: #{tpu_custom_call.1} parent=1 // pred_check_branch
      %100 = sbr.rel (0) target = $region41
    $region40: #{tpu_custom_call.1} parent=1 // pred_region
      %101 = dma.done [#allocation6], 16
    $region41: #{tpu_custom_call.1} parent=1 // pred_fallthru
      _
    // Predicated region
    $region42: #{tpu_custom_call.1} parent=1 // pred_check
      _
    $region43: #{tpu_custom_call.1} parent=1 // pred_check_branch
      %103 = sbr.rel (0) target = $region45
    $region44: #{tpu_custom_call.1} parent=1 // pred_region
      %104 = dma.done [#allocation9], 1024
    $region45: #{tpu_custom_call.1} parent=1 // pred_fallthru
      _
    // Predicated region
    $region46: #{tpu_custom_call.1} parent=1 // pred_check
      _
    $region47: #{tpu_custom_call.1} parent=1 // pred_check_branch
      %106 = sbr.rel (0) target = $region49
    $region48: #{tpu_custom_call.1} parent=1 // pred_region
      %107 = dma.done [#allocation9], 16
    $region49: #{tpu_custom_call.1} parent=1 // pred_fallthru
      _
    // Predicated region
    $region50: #{tpu_custom_call.1} parent=1 // pred_check
      _
    $region51: #{tpu_custom_call.1} parent=1 // pred_check_branch
      %109 = sbr.rel (0) target = $region53
    $region52: #{tpu_custom_call.1} parent=1 // pred_region
      %110 = dma.done [#allocation12], 512
    $region53: #{tpu_custom_call.1} parent=1 // pred_fallthru
      _
    // Predicated region
    $region54: #{tpu_custom_call.1} parent=1 // pred_check
      _
    $region55: #{tpu_custom_call.1} parent=1 // pred_check_branch
      %112 = sbr.rel (0) target = $region57
    $region56: #{tpu_custom_call.1} parent=1 // pred_region
      %113 = dma.done [#allocation12], 16
    $region57: #{tpu_custom_call.1} parent=1 // pred_fallthru
      _
    %v114 = vld [vmem:[#allocation2] sm:$0xff]
    %v115 = vld [vmem:[#allocation5] sm:$0xff]
    %v116 = vld [vmem:[#allocation5 + $0x8] sm:$0xff]
    %v117 = vld [vmem:[#allocation5 + $0x10] sm:$0xff]
    %v118 = vld [vmem:[#allocation5 + $0x18] sm:$0xff]
    %v119 = vld [vmem:[#allocation7] sm:$0x1]
    %v121 = vlaneseq
    %v122 = vshrl.u32 %v121, 7
    %v123 = vsub.s32 0, %v122
    %v124 = vrot.slane %v119, %v123
    %vm126 = vcmask 261120
    %v128 = vsel %vm126, %v114, 0
    %130 = vmatprep.subr.mxu0 0.0
    %131 = vmatpush1.msra.mxu0 %v115
    %132 = vmatprep.subr.mxu0 0.0
    %133 = vmatpush1.msra.mxu0 %v116
    %134 = vmatprep.subr.mxu0 0.0
    %135 = vmatpush1.msra.mxu0 %v117
    %136 = vmatprep.subr.mxu0 0.0
    %137 = vmatpush1.msra.mxu0 %v118
    %138 = vmatprep.subr.mxu0 0.0
    %139 = vmatpush1.msra.mxu0 0.0
    %140 = vmatprep.subr.mxu0 0.0
    %141 = vmatpush1.msra.mxu0 0.0
    %142 = vmatprep.subr.mxu0 0.0
    %143 = vmatpush1.msra.mxu0 0.0
    %144 = vmatprep.subr.mxu0 0.0
    %145 = vmatpush1.msra.mxu0 0.0
    %146 = vmatprep.subr.mxu0 0.0
    %147 = vmatpush1.msra.mxu0 0.0
    %148 = vmatprep.subr.mxu0 0.0
    %149 = vmatpush1.msra.mxu0 0.0
    %150 = vmatprep.subr.mxu0 0.0
    %151 = vmatpush1.msra.mxu0 0.0
    %152 = vmatprep.subr.mxu0 0.0
    %153 = vmatpush1.msra.mxu0 0.0
    %154 = vmatprep.subr.mxu0 0.0
    %155 = vmatpush1.msra.mxu0 0.0
    %156 = vmatprep.subr.mxu0 0.0
    %157 = vmatpush1.msra.mxu0 0.0
    %158 = vmatprep.subr.mxu0 0.0
    %159 = vmatpush1.msra.mxu0 0.0
    %160 = vmatprep.subr.mxu0 0.0
    %161 = vmatpush1.msra.mxu0 0.0
    %162 = vmatprep.subr.mxu0 0.0
    %163 = vmatpush1.msra.mxu0 0.0
    %164 = vmatprep.subr.mxu0 0.0
    %165 = vmatpush1.msra.mxu0 0.0
    %166 = vmatprep.subr.mxu0 0.0
    %167 = vmatpush1.msra.mxu0 0.0
    %168 = vmatprep.subr.mxu0 0.0
    %169 = vmatpush1.msra.mxu0 0.0
    %170 = vmatprep.subr.mxu0 0.0
    %171 = vmatpush1.msra.mxu0 0.0
    %172 = vmatprep.subr.mxu0 0.0
    %173 = vmatpush1.msra.mxu0 0.0
    %174 = vmatprep.subr.mxu0 0.0
    %175 = vmatpush1.msra.mxu0 0.0
    %176 = vmatprep.subr.mxu0 0.0
    %177 = vmatpush1.msra.mxu0 0.0
    %178 = vmatprep.subr.mxu0 0.0
    %179 = vmatpush1.msra.mxu0 0.0
    %180 = vmatprep.subr.mxu0 0.0
    %181 = vmatpush1.msra.mxu0 0.0
    %182 = vmatprep.subr.mxu0 0.0
    %183 = vmatpush1.msra.mxu0 0.0
    %184 = vmatprep.subr.mxu0 0.0
    %185 = vmatpush1.msra.mxu0 0.0
    %186 = vmatprep.subr.mxu0 0.0
    %187 = vmatpush1.msra.mxu0 0.0
    %188 = vmatprep.subr.mxu0 0.0
    %189 = vmatpush1.msra.mxu0 0.0
    %190 = vmatprep.subr.mxu0 0.0
    %191 = vmatpush1.msra.mxu0 0.0
    %192 = vmatprep.subr.mxu0 0.0
    %193 = vmatpush1.msra.mxu0 0.0
    %194 = vmatprep.mubr.f32.mxu0 0.0
    %195 = vmatmul.mubr.f32.gmra.mrb[0].mxu0 %v128
    %v196 = vpop.f32.mrb[0].mxu0
    %v197 = vadd.f32 %v124, %v196
    %v198 = vpop.f32.mrb[0].mxu0
    %199 = vdwg.mxu0
    %vm200 = vcmp.gt.f32.partialorder %v197, 0.0
    %v201 = vmul.f32 %v197, 0.01
    %v202 = vsel %vm200, %v197, %v201
    %v203 = vld [vmem:[#allocation8] sm:$0xff]
    %v204 = vld [vmem:[#allocation8 + $0x8] sm:$0xff]
    %v205 = vld [vmem:[#allocation8 + $0x10] sm:$0xff]
    %v206 = vld [vmem:[#allocation8 + $0x18] sm:$0xff]
    %v207 = vld [vmem:[#allocation8 + $0x20] sm:$0xff]
    %v208 = vld [vmem:[#allocation8 + $0x28] sm:$0xff]
    %v209 = vld [vmem:[#allocation8 + $0x30] sm:$0xff]
    %v210 = vld [vmem:[#allocation8 + $0x38] sm:$0xff]
    %v211 = vld [vmem:[#allocation10] sm:$0x1]
    %v213 = vlaneseq
    %v214 = vshrl.u32 %v213, 7
    %v215 = vsub.s32 0, %v214
    %v216 = vrot.slane %v211, %v215
    %vm218 = vcmask 523264
    %v220 = vsel %vm218, %v202, 0
    %222 = vmatprep.subr.mxu0 0.0
    %223 = vmatpush1.msra.mxu0 %v203
    %224 = vmatprep.subr.mxu0 0.0
    %225 = vmatpush1.msra.mxu0 %v204
    %226 = vmatprep.subr.mxu0 0.0
    %227 = vmatpush1.msra.mxu0 %v205
    %228 = vmatprep.subr.mxu0 0.0
    %229 = vmatpush1.msra.mxu0 %v206
    %230 = vmatprep.subr.mxu0 0.0
    %231 = vmatpush1.msra.mxu0 %v207
    %232 = vmatprep.subr.mxu0 0.0
    %233 = vmatpush1.msra.mxu0 %v208
    %234 = vmatprep.subr.mxu0 0.0
    %235 = vmatpush1.msra.mxu0 %v209
    %236 = vmatprep.subr.mxu0 0.0
    %237 = vmatpush1.msra.mxu0 %v210
    %238 = vmatprep.subr.mxu0 0.0
    %239 = vmatpush1.msra.mxu0 0.0
    %240 = vmatprep.subr.mxu0 0.0
    %241 = vmatpush1.msra.mxu0 0.0
    %242 = vmatprep.subr.mxu0 0.0
    %243 = vmatpush1.msra.mxu0 0.0
    %244 = vmatprep.subr.mxu0 0.0
    %245 = vmatpush1.msra.mxu0 0.0
    %246 = vmatprep.subr.mxu0 0.0
    %247 = vmatpush1.msra.mxu0 0.0
    %248 = vmatprep.subr.mxu0 0.0
    %249 = vmatpush1.msra.mxu0 0.0
    %250 = vmatprep.subr.mxu0 0.0
    %251 = vmatpush1.msra.mxu0 0.0
    %252 = vmatprep.subr.mxu0 0.0
    %253 = vmatpush1.msra.mxu0 0.0
    %254 = vmatprep.subr.mxu0 0.0
    %255 = vmatpush1.msra.mxu0 0.0
    %256 = vmatprep.subr.mxu0 0.0
    %257 = vmatpush1.msra.mxu0 0.0
    %258 = vmatprep.subr.mxu0 0.0
    %259 = vmatpush1.msra.mxu0 0.0
    %260 = vmatprep.subr.mxu0 0.0
    %261 = vmatpush1.msra.mxu0 0.0
    %262 = vmatprep.subr.mxu0 0.0
    %263 = vmatpush1.msra.mxu0 0.0
    %264 = vmatprep.subr.mxu0 0.0
    %265 = vmatpush1.msra.mxu0 0.0
    %266 = vmatprep.subr.mxu0 0.0
    %267 = vmatpush1.msra.mxu0 0.0
    %268 = vmatprep.subr.mxu0 0.0
    %269 = vmatpush1.msra.mxu0 0.0
    %270 = vmatprep.subr.mxu0 0.0
    %271 = vmatpush1.msra.mxu0 0.0
    %272 = vmatprep.subr.mxu0 0.0
    %273 = vmatpush1.msra.mxu0 0.0
    %274 = vmatprep.subr.mxu0 0.0
    %275 = vmatpush1.msra.mxu0 0.0
    %276 = vmatprep.subr.mxu0 0.0
    %277 = vmatpush1.msra.mxu0 0.0
    %278 = vmatprep.subr.mxu0 0.0
    %279 = vmatpush1.msra.mxu0 0.0
    %280 = vmatprep.subr.mxu0 0.0
    %281 = vmatpush1.msra.mxu0 0.0
    %282 = vmatprep.subr.mxu0 0.0
    %283 = vmatpush1.msra.mxu0 0.0
    %284 = vmatprep.subr.mxu0 0.0
    %285 = vmatpush1.msra.mxu0 0.0
    %286 = vmatprep.mubr.f32.mxu0 0.0
    %287 = vmatmul.mubr.f32.gmra.mrb[0].mxu0 %v220
    %v288 = vpop.f32.mrb[0].mxu0
    %v289 = vadd.f32 %v216, %v288
    %v290 = vpop.f32.mrb[0].mxu0
    %291 = vdwg.mxu0
    %vm292 = vcmp.gt.f32.partialorder %v289, 0.0
    %v293 = vmul.f32 %v289, 0.01
    %v294 = vsel %vm292, %v289, %v293
    %v295 = vld [vmem:[#allocation11] sm:$0xff]
    %v296 = vld [vmem:[#allocation11 + $0x8] sm:$0xff]
    %v297 = vld [vmem:[#allocation11 + $0x10] sm:$0xff]
    %v298 = vld [vmem:[#allocation11 + $0x18] sm:$0xff]
    %v299 = vld [vmem:[#allocation13] sm:$0x1]
    %v301 = vlaneseq
    %v302 = vshrl.u32 %v301, 7
    %v303 = vsub.s32 0, %v302
    %v304 = vrot.slane %v299, %v303
    %v307 = vsel %vm126, %v294, 0
    %309 = vmatprep.subr.mxu0 0.0
    %310 = vmatpush1.msra.mxu0 %v295
    %311 = vmatprep.subr.mxu0 0.0
    %312 = vmatpush1.msra.mxu0 %v296
    %313 = vmatprep.subr.mxu0 0.0
    %314 = vmatpush1.msra.mxu0 %v297
    %315 = vmatprep.subr.mxu0 0.0
    %316 = vmatpush1.msra.mxu0 %v298
    %317 = vmatprep.subr.mxu0 0.0
    %318 = vmatpush1.msra.mxu0 0.0
    %319 = vmatprep.subr.mxu0 0.0
    %320 = vmatpush1.msra.mxu0 0.0
    %321 = vmatprep.subr.mxu0 0.0
    %322 = vmatpush1.msra.mxu0 0.0
    %323 = vmatprep.subr.mxu0 0.0
    %324 = vmatpush1.msra.mxu0 0.0
    %325 = vmatprep.subr.mxu0 0.0
    %326 = vmatpush1.msra.mxu0 0.0
    %327 = vmatprep.subr.mxu0 0.0
    %328 = vmatpush1.msra.mxu0 0.0
    %329 = vmatprep.subr.mxu0 0.0
    %330 = vmatpush1.msra.mxu0 0.0
    %331 = vmatprep.subr.mxu0 0.0
    %332 = vmatpush1.msra.mxu0 0.0
    %333 = vmatprep.subr.mxu0 0.0
    %334 = vmatpush1.msra.mxu0 0.0
    %335 = vmatprep.subr.mxu0 0.0
    %336 = vmatpush1.msra.mxu0 0.0
    %337 = vmatprep.subr.mxu0 0.0
    %338 = vmatpush1.msra.mxu0 0.0
    %339 = vmatprep.subr.mxu0 0.0
    %340 = vmatpush1.msra.mxu0 0.0
    %341 = vmatprep.subr.mxu0 0.0
    %342 = vmatpush1.msra.mxu0 0.0
    %343 = vmatprep.subr.mxu0 0.0
    %344 = vmatpush1.msra.mxu0 0.0
    %345 = vmatprep.subr.mxu0 0.0
    %346 = vmatpush1.msra.mxu0 0.0
    %347 = vmatprep.subr.mxu0 0.0
    %348 = vmatpush1.msra.mxu0 0.0
    %349 = vmatprep.subr.mxu0 0.0
    %350 = vmatpush1.msra.mxu0 0.0
    %351 = vmatprep.subr.mxu0 0.0
    %352 = vmatpush1.msra.mxu0 0.0
    %353 = vmatprep.subr.mxu0 0.0
    %354 = vmatpush1.msra.mxu0 0.0
    %355 = vmatprep.subr.mxu0 0.0
    %356 = vmatpush1.msra.mxu0 0.0
    %357 = vmatprep.subr.mxu0 0.0
    %358 = vmatpush1.msra.mxu0 0.0
    %359 = vmatprep.subr.mxu0 0.0
    %360 = vmatpush1.msra.mxu0 0.0
    %361 = vmatprep.subr.mxu0 0.0
    %362 = vmatpush1.msra.mxu0 0.0
    %363 = vmatprep.subr.mxu0 0.0
    %364 = vmatpush1.msra.mxu0 0.0
    %365 = vmatprep.subr.mxu0 0.0
    %366 = vmatpush1.msra.mxu0 0.0
    %367 = vmatprep.subr.mxu0 0.0
    %368 = vmatpush1.msra.mxu0 0.0
    %369 = vmatprep.subr.mxu0 0.0
    %370 = vmatpush1.msra.mxu0 0.0
    %371 = vmatprep.subr.mxu0 0.0
    %372 = vmatpush1.msra.mxu0 0.0
    %373 = vmatprep.mubr.f32.mxu0 0.0
    %374 = vmatmul.mubr.f32.gmra.mrb[0].mxu0 %v307
    %v375 = vpop.f32.mrb[0].mxu0
    %v376 = vadd.f32 %v304, %v375
    %v377 = vpop.f32.mrb[0].mxu0
    %378 = vdwg.mxu0
    %379 = vmax.xlane.f32.xlu0 %v376
    %v380 = vpop.xlane.xlu0 %379
    %v381 = vsub.f32 %v376, %v380
    %v382 = vmul.f32 %v381, 1.442695
    %v383 = vpow.pop %v382
    %384 = vadd.xlane.f32.xlu0 %v383
    %v385 = vpop.xlane.xlu0 %384
    %v386 = vlog2.pop %v385
    %v387 = vmul.f32 %v386, 0.6931472
    %v388 = vsub.f32 %v381, %v387
    %389 = vst [vmem:[#allocation14] sm:$0xff] %v388
    // Predicated region
    $region58: #{tpu_custom_call.1} parent=1 // pred_check
      _
    $region59: #{tpu_custom_call.1} parent=1 // pred_check_branch
      %391 = sbr.rel (0) target = $region61
    $region60: #{tpu_custom_call.1} parent=1 // pred_region
      %s393 = ssub.s32 128, 128
      %394 = vsyncadd [#allocation4], %s393
      %s396 = sshll.u32 [#allocation14], 4
      %s397 = int_to_ptr.vmem [resolvable:$true] %s396
      %399 = dma.vmem_to_hbm [thread:$0]  %s397, 128, %s7, [#allocation4]
    $region61: #{tpu_custom_call.1} parent=1 // pred_fallthru
      _
    // Predicated region
    $region62: #{tpu_custom_call.1} parent=1 // pred_check
      _
    $region63: #{tpu_custom_call.1} parent=1 // pred_check_branch
      %401 = sbr.rel (0) target = $region65
    $region64: #{tpu_custom_call.1} parent=1 // pred_region
      %402 = dma.done [#allocation4], 128
    $region65: #{tpu_custom_call.1} parent=1 // pred_fallthru
      _
    %403 = vsyncpa [#allocation3], 1
    %404 = vsyncpa [#allocation6], 1
    %405 = vsyncpa [#allocation9], 1
    %406 = vsyncpa [#allocation12], 1
    %407 = vsyncpa [#allocation4], 1

</llo_original>
